<compile_context>
chip_gen: v7x
topology: tpu7x:2x2x1
jax: 0.10.0
libtpu: 0.0.40
codegen_flags: <defaults>
</compile_context>

<pallas_src>
import functools

import jax
import jax.numpy as jnp
from jax.experimental import pallas as pl
from jax.experimental.pallas import tpu as pltpu


def _round_up(x, m):
    return ((x + m - 1) // m) * m


def _nll_loss_kernel(pred_ref, target_ref, out_ref, acc_ref, *,
                     num_rows, tile_m, tiles_per_core, mask_tail):
    """Accumulates sum_i pred[i, target[i]] over row-tiles of pred."""
    p = pl.program_id(0)      # parallel split (dual-TC on v7x); size 1 or 2
    i = pl.program_id(1)      # sequential reduction over row tiles ("arbitrary")

    @pl.when(i == 0)
    def _init():
        acc_ref[...] = jnp.zeros_like(acc_ref)

    pred = pred_ref[...]                    # (tm, c) native dtype (bf16 / f32)
    tgt = target_ref[...]                   # (1, tm) int32, lane-major
    tm, c = pred.shape

    if mask_tail:
        # Ragged tail (pred is NOT padded in HBM): zero out rows past the true
        # M so no garbage (possibly NaN bit patterns) ever reaches the MXU.
        tile_start = (p * tiles_per_core + i) * tile_m
        row_ids = jax.lax.broadcasted_iota(jnp.int32, (tm, c), 0) + tile_start
        pred = jnp.where(row_ids < num_rows, pred, jnp.zeros_like(pred))

    # Transposed one-hot built directly in the target's lane-major layout:
    # onehot_t[j, r] = (target[r] == j).  The (1, tm) labels broadcast along
    # sublanes for free -> no lane<->sublane relayout needed.  Padded rows
    # carry target = -1 and match no class.
    class_ids = jax.lax.broadcasted_iota(jnp.int32, (c, tm), 0)
    onehot_t = (class_ids == tgt).astype(pred.dtype)            # (c, tm)

    # MXU gather: (onehot_t @ pred)[j, k] = sum_{r : tgt[r]==j} pred[r, k].
    # The diagonal (k == j) is the NLL contribution; the cheap (c, c) matrix is
    # accumulated in f32 and the diagonal is extracted once at the end.
    precision = (jax.lax.Precision.HIGHEST
                 if pred_ref.dtype == jnp.float32 else jax.lax.Precision.DEFAULT)
    acc_ref[...] += jnp.dot(onehot_t, pred,
                            preferred_element_type=jnp.float32,
                            precision=precision)

    @pl.when(i == pl.num_programs(1) - 1)
    def _finalize():
        cc = acc_ref.shape[0]
        diag = (jax.lax.broadcasted_iota(jnp.int32, (cc, cc), 0) ==
                jax.lax.broadcasted_iota(jnp.int32, (cc, cc), 1))
        total = jnp.sum(jnp.where(diag, acc_ref[...], 0.0))
        out_ref[...] = jnp.broadcast_to(total, out_ref.shape)


def nll_loss_pallas(pred, target, trans_feat=None, *, tile_m=4096):
    """JAX wrapper matching get_loss.forward(pred, target, trans_feat)."""
    del trans_feat  # unused by the reference module
    m, c = pred.shape
    target = target.astype(jnp.int32)

    # Row-tile size: multiple of 8 sublanes; multiple of 128 whenever the row
    # dimension is actually tiled (lane-dense (1, tm) target block legality).
    tm = min(tile_m, _round_up(m, 8))
    tm = max(8, (tm // 8) * 8)
    if pl.cdiv(m, tm) > 1:
        tm = _round_up(tm, 128)
    num_tiles = pl.cdiv(m, tm)

    # pred stays UNPADDED (in-kernel row mask handles the ragged tail); only
    # the tiny int32 target is padded (lane-major, -1 marks padded rows).
    m_pad = num_tiles * tm
    if m_pad != m:
        target = jnp.pad(target, (0, m_pad - m), constant_values=-1)
    target2d = target.reshape(1, m_pad)

    # v7x has two TensorCores: split the row tiles over a leading "parallel"
    # axis when there are enough of them.  On 1-TC chips this is a no-op.
    split = 2 if (num_tiles >= 8 and num_tiles % 2 == 0) else 1
    tiles_per_core = num_tiles // split

    # Scoped-VMEM budget: double-buffered pred + target tiles, headroom for
    # Mosaic temporaries (iota / one-hot / mask) and the tiny accumulator.
    lane = 128
    c_lanes = _round_up(c, lane)
    pred_buf = tm * c_lanes * pred.dtype.itemsize
    tgt_buf = tm * 32                      # (1, tm) i32 block uses 1/8 sublanes
    est = 2 * (pred_buf + tgt_buf) + 4 * tm * c_lanes * 4 + (1 << 20)
    vmem_limit = int(min(max(est + est // 2, 16 << 20), 48 << 20))

    kernel = functools.partial(
        _nll_loss_kernel,
        num_rows=m, tile_m=tm, tiles_per_core=tiles_per_core,
        mask_tail=(m_pad != m))

    out = pl.pallas_call(
        kernel,
        out_shape=jax.ShapeDtypeStruct((split, 8, 128), jnp.float32),
        grid_spec=pltpu.PrefetchScalarGridSpec(
            num_scalar_prefetch=0,
            grid=(split, tiles_per_core),
            in_specs=[
                pl.BlockSpec((tm, c), lambda p, i: (p * tiles_per_core + i, 0)),
                pl.BlockSpec((1, tm), lambda p, i: (0, p * tiles_per_core + i)),
            ],
            out_specs=pl.BlockSpec((1, 8, 128), lambda p, i: (p, 0, 0)),
            scratch_shapes=[pltpu.VMEM((c, c), jnp.float32)],
        ),
        compiler_params=pltpu.CompilerParams(
            dimension_semantics=("parallel", "arbitrary"),
            vmem_limit_bytes=vmem_limit,
        ),
    )(pred, target2d)

    # Mean reduction over the ORIGINAL number of rows, negate.
    # TODO(synk): F.nll_loss ignore_index=-100 renormalization is not reproduced.
    return -jnp.sum(out[:, 0, 0]) / jnp.float32(m)


def nll_loss_ref(pred, target):
    """Pure-JAX reference (F.nll_loss with mean reduction)."""
    picked = jnp.take_along_axis(
        pred.astype(jnp.float32), target[:, None].astype(jnp.int32), axis=1)
    return -jnp.mean(picked)


if __name__ == "__main__":
    key = jax.random.PRNGKey(0)
    k_logits, k_tgt, k_feat = jax.random.split(key, 3)

    # Part-seg style shapes: B=2 batches of N=128 points -> M=256 rows, C=16 classes.
    B, N, C = 2, 128, 16
    M = B * N
    logits = jax.random.normal(k_logits, (M, C), dtype=jnp.float32)
    pred = jax.nn.log_softmax(logits, axis=-1)                  # log-probabilities
    target = jax.random.randint(k_tgt, (M,), 0, C, dtype=jnp.int32)
    trans_feat = jax.random.normal(k_feat, (B, 64, 64), dtype=jnp.float32)  # unused

    loss = jax.block_until_ready(nll_loss_pallas(pred, target, trans_feat))
    ref = nll_loss_ref(pred, target)
    assert jnp.allclose(loss, ref, atol=1e-5, rtol=1e-5), (loss, ref)

    # Multi-tile + ragged tail (no pred padding) + native bf16 input.
    M2, C2 = 2056, 50
    logits2 = jax.random.normal(k_logits, (M2, C2), dtype=jnp.float32)
    pred2 = jax.nn.log_softmax(logits2, axis=-1).astype(jnp.bfloat16)
    target2 = jax.random.randint(k_tgt, (M2,), 0, C2, dtype=jnp.int32)
    loss2 = jax.block_until_ready(nll_loss_pallas(pred2, target2, None, tile_m=512))
    ref2 = nll_loss_ref(pred2, target2)
    assert jnp.allclose(loss2, ref2, atol=5e-3, rtol=5e-3), (loss2, ref2)

    # Enough tiles to exercise the 2-way parallel split (v7x dual-TC path).
    M3, C3 = 8192, 50
    logits3 = jax.random.normal(k_logits, (M3, C3), dtype=jnp.float32)
    pred3 = jax.nn.log_softmax(logits3, axis=-1).astype(jnp.bfloat16)
    target3 = jax.random.randint(k_tgt, (M3,), 0, C3, dtype=jnp.int32)
    loss3 = jax.block_until_ready(nll_loss_pallas(pred3, target3, None, tile_m=512))
    ref3 = nll_loss_ref(pred3, target3)
    assert jnp.allclose(loss3, ref3, atol=5e-3, rtol=5e-3), (loss3, ref3)

    print("KERNEL_OK")
</pallas_src>

<mosaic_0001>
module attributes {stable_mosaic.version = 11 : i64} {
  func.func @_nll_loss_kernel(%arg0: i32, %arg1: i32, %arg2: memref<256x16xf32, #tpu.memory_space<vmem>>, %arg3: memref<1x256xi32, #tpu.memory_space<vmem>>, %arg4: memref<1x8x128xf32, #tpu.memory_space<vmem>>, %arg5: memref<16x16xf32, #tpu.memory_space<vmem>>) attributes {dimension_semantics = [#tpu.dimension_semantics<parallel>, #tpu.dimension_semantics<arbitrary>], iteration_bounds = array<i64: 1, 1>, scalar_prefetch = 0 : i64, scratch_operands = 1 : i64, tpu.core_type = #tpu.core_type<tc>, window_params = [{transform_indices = @transform_0, window_bounds = array<i64: 256, 16>}, {transform_indices = @transform_1, window_bounds = array<i64: 1, 256>}, {transform_indices = @transform_2, window_bounds = array<i64: 1, 8, 128>}]} {
    %c0_i32 = arith.constant 0 : i32
    %0 = arith.cmpi eq, %arg1, %c0_i32 : i32
    %1 = arith.extui %0 : i1 to i32
    %c0_i32_0 = arith.constant 0 : i32
    %2 = arith.cmpi ne, %1, %c0_i32_0 : i32
    scf.if %2 {
      %cst_10 = arith.constant 0.000000e+00 : f32
      %17 = vector.broadcast %cst_10 : f32 to vector<16x16xf32>
      %c0_11 = arith.constant 0 : index
      %c0_12 = arith.constant 0 : index
      %18 = vector.load %arg5[%c0_11, %c0_12] : memref<16x16xf32, #tpu.memory_space<vmem>>, vector<16x16xf32>
      tpu.vector_store %arg5[%c0_11, %c0_12], %17 {strides = array<i32>} : memref<16x16xf32, #tpu.memory_space<vmem>>, vector<16x16xf32>,
    } else {
    }
    %c0 = arith.constant 0 : index
    %c0_1 = arith.constant 0 : index
    %3 = vector.load %arg2[%c0, %c0_1] : memref<256x16xf32, #tpu.memory_space<vmem>>, vector<256x16xf32>
    %c0_2 = arith.constant 0 : index
    %c0_3 = arith.constant 0 : index
    %4 = vector.load %arg3[%c0_2, %c0_3] : memref<1x256xi32, #tpu.memory_space<vmem>>, vector<1x256xi32>
    %5 = tpu.iota {dimensions = array<i32: 0>} : vector<16x256xi32>
    %6 = vector.broadcast %4 : vector<1x256xi32> to vector<16x256xi32>
    %7 = arith.cmpi eq, %5, %6 : vector<16x256xi32>
    %8 = arith.extui %7 : vector<16x256xi1> to vector<16x256xi32>
    %9 = arith.sitofp %8 : vector<16x256xi32> to vector<16x256xf32>
    %c0_4 = arith.constant 0 : index
    %c0_5 = arith.constant 0 : index
    %10 = vector.load %arg5[%c0_4, %c0_5] : memref<16x16xf32, #tpu.memory_space<vmem>>, vector<16x16xf32>
    %cst = arith.constant dense<0.000000e+00> : vector<16x16xf32>
    %11 = tpu.matmul %9, %3, %cst {dimension_numbers = #tpu.dot_dimension_numbers<[1], [0], [0], [1], [0, 0, 1, 1], [], []>, precision = #tpu.contract_precision<fp32>} : vector<16x256xf32>, vector<256x16xf32>, vector<16x16xf32> -> vector<16x16xf32>
    %12 = arith.addf %10, %11 : vector<16x16xf32>
    %c0_6 = arith.constant 0 : index
    %c0_7 = arith.constant 0 : index
    %13 = vector.load %arg5[%c0_6, %c0_7] : memref<16x16xf32, #tpu.memory_space<vmem>>, vector<16x16xf32>
    tpu.vector_store %arg5[%c0_6, %c0_7], %12 {strides = array<i32>} : memref<16x16xf32, #tpu.memory_space<vmem>>, vector<16x16xf32>,
    %c0_i32_8 = arith.constant 0 : i32
    %14 = arith.cmpi eq, %arg1, %c0_i32_8 : i32
    %15 = arith.extui %14 : i1 to i32
    %c0_i32_9 = arith.constant 0 : i32
    %16 = arith.cmpi ne, %15, %c0_i32_9 : i32
    scf.if %16 {
      %17 = tpu.iota {dimensions = array<i32: 0>} : vector<16x16xi32>
      %18 = tpu.iota {dimensions = array<i32: 1>} : vector<16x16xi32>
      %19 = arith.cmpi eq, %17, %18 : vector<16x16xi32>
      %c0_10 = arith.constant 0 : index
      %c0_11 = arith.constant 0 : index
      %20 = vector.load %arg5[%c0_10, %c0_11] : memref<16x16xf32, #tpu.memory_space<vmem>>, vector<16x16xf32>
      %cst_12 = arith.constant 0.000000e+00 : f32
      %21 = vector.broadcast %cst_12 : f32 to vector<16x16xf32>
      %22 = arith.select %19, %20, %21 : vector<16x16xi1>, vector<16x16xf32>
      %23 = vector.shape_cast %22 : vector<16x16xf32> to vector<1x16x16xf32>
      %cst_13 = arith.constant dense<0.000000e+00> : vector<1xf32>
      %24 = vector.multi_reduction <add>, %23, %cst_13 [1, 2] : vector<1x16x16xf32> to vector<1xf32>
      %25 = vector.shape_cast %24 : vector<1xf32> to vector<1x1x1xf32>
      %26 = vector.extract %25[0, 0, 0] : f32 from vector<1x1x1xf32>
      %27 = vector.broadcast %26 : f32 to vector<1x8x128xf32>
      %c0_14 = arith.constant 0 : index
      %c0_15 = arith.constant 0 : index
      %c0_16 = arith.constant 0 : index
      %28 = vector.load %arg4[%c0_14, %c0_15, %c0_16] : memref<1x8x128xf32, #tpu.memory_space<vmem>>, vector<1x8x128xf32>
      tpu.vector_store %arg4[%c0_14, %c0_15, %c0_16], %27 {strides = array<i32>} : memref<1x8x128xf32, #tpu.memory_space<vmem>>, vector<1x8x128xf32>,
    } else {
    }
    return
  }
  func.func @transform_0(%arg0: i32, %arg1: i32) -> (i32, i32) {
    %c1_i32 = arith.constant 1 : i32
    %0 = arith.muli %arg0, %c1_i32 : i32
    %1 = arith.addi %0, %arg1 : i32
    %c0_i32 = arith.constant 0 : i32
    %c0_i32_0 = arith.constant 0 : i32
    return %1, %c0_i32 : i32, i32
  }
  func.func @transform_1(%arg0: i32, %arg1: i32) -> (i32, i32) {
    %c1_i32 = arith.constant 1 : i32
    %0 = arith.muli %arg0, %c1_i32 : i32
    %1 = arith.addi %0, %arg1 : i32
    %c0_i32 = arith.constant 0 : i32
    %c0_i32_0 = arith.constant 0 : i32
    return %c0_i32, %1 : i32, i32
  }
  func.func @transform_2(%arg0: i32, %arg1: i32) -> (i32, i32, i32) {
    %c0_i32 = arith.constant 0 : i32
    %c0_i32_0 = arith.constant 0 : i32
    %c0_i32_1 = arith.constant 0 : i32
    return %arg0, %c0_i32, %c0_i32_0 : i32, i32, i32
  }
}

</mosaic_0001>

<llo_original>
// kernel: tpu_custom_call.1
$region0: #{tpu_custom_call.1}
  #allocation0 [shape = 'u32[]', space=smem, size = 0x4, offset = 0x4, fixed_abs, tag = 'smem constant byte address 0x4 - core index']
  #allocation1 [shape = 'u32[144,128]{1,0:T(1,128)}', space=vmem, size = 0x12000, scoped, tag = 'internal scratch']
  #allocation2 [shape = 'f32[16,16]{1,0:T(8,128)}', space=vmem, size = 0x2000, scoped, tag = 'scratch operand']
  %s0 = inlined_call_operand.vmem [shape: f32[256,16], index: 0, kind: input, shape index: {}]
  %s1 = inlined_call_operand.vmem [shape: s32[1,256], index: 1, kind: input, shape index: {}]
  %s2 = inlined_call_operand.hbm [shape: f32[1,8,128], index: 2, kind: output, shape index: {}]
  %s3 = sld [smem:[#allocation0]]
  $region26: #{tpu_custom_call.1} parent=0
    _
  %s5 = ssub.s32 1, %s3
  %s6 = scalar_select 0, %s5, %s3
  $region1: #{tpu_custom_call.1} parent=0
    #allocation3 [shape = 'u8[4096]{0}', space=vmem, size = 0x1000, scoped, tag = 'output window, operand 0, single buffered']
    #allocation4 [shape = 's32[1]{0}', space=sflag, size = 0x4, scoped, tag = 'scoped memory for tpu_custom_call.1']
    %7 = vsyncpa [#allocation4], 0
    // Predicated region
    $region2: #{tpu_custom_call.1} parent=1 // pred_check
      _
    $region3: #{tpu_custom_call.1} parent=1 // pred_check_branch
      %9 = sbr.rel (0) target = $region5
    $region4: #{tpu_custom_call.1} parent=1 // pred_region
      %s10 = sadd.s32 0, 0
      %s11 = smul.u32 32, %s10
      %p12 = scmp.lt.s32.totalorder %s11, 31
      %s13 = scalar_select %p12, %s11, 31
      %s14 = smul.addr %s13, 8
      %s15 = scalar_lea.vmem %s0, %s14
      %s16 = sadd.s32 0, 0
      %s17 = smul.u32 32, %s16
    $region5: #{tpu_custom_call.1} parent=1 // pred_fallthru
      _
    // Predicated region
    $region6: #{tpu_custom_call.1} parent=1 // pred_check
      _
    $region7: #{tpu_custom_call.1} parent=1 // pred_check_branch
      %19 = sbr.rel (0) target = $region9
    $region8: #{tpu_custom_call.1} parent=1 // pred_region
      %s20 = sadd.s32 0, 0
      %s21 = smul.u32 2, %s20
      %p22 = scmp.lt.s32.totalorder %s21, 1
      %s23 = scalar_select %p22, %s21, 1
      %s24 = scalar_lea.vmem %s1, %s23
      %s25 = sadd.s32 0, 0
      %s26 = smul.u32 2, %s25
    $region9: #{tpu_custom_call.1} parent=1 // pred_fallthru
      _
    %s27 = sadd.s32 0, 0
    %s28 = smul.u32 32, %s27
    %p29 = scmp.lt.s32.totalorder %s28, 31
    %s30 = scalar_select %p29, %s28, 31
    %s31 = smul.addr %s30, 8
    %s32 = scalar_lea.vmem %s0, %s31
    %s33 = sadd.s32 0, 0
    %s34 = smul.u32 2, %s33
    %p35 = scmp.lt.s32.totalorder %s34, 1
    %s36 = scalar_select %p35, %s34, 1
    %s37 = scalar_lea.vmem %s1, %s36
    %s38 = sadd.s32 0, 0
    %s39 = smul.u32 32, %s38
    %p40 = scmp.lt.s32.totalorder %s39, 31
    %s41 = scalar_select %p40, %s39, 31
    %s42 = smul.addr %s41, 8
    %s43 = scalar_lea.vmem %s0, %s42
    %s44 = sadd.s32 0, 0
    %s45 = smul.u32 32, %s44
    %s46 = sadd.s32 0, 0
    %s47 = smul.u32 2, %s46
    %p48 = scmp.lt.s32.totalorder %s47, 1
    %s49 = scalar_select %p48, %s47, 1
    %s50 = scalar_lea.vmem %s1, %s49
    %s51 = sadd.s32 0, 0
    %s52 = smul.u32 2, %s51
    %p53 = scmp.eq.s32.totalorder 0, 0
    // Predicated region
    $region10: #{tpu_custom_call.1} parent=1 // pred_check
      %p54 = pneg %p53
    $region11: #{tpu_custom_call.1} parent=1 // pred_check_branch
      %56 = sbr.rel (%p54) target = $region13
    $region12: #{tpu_custom_call.1} parent=1 // pred_region
      %vm57 = vcmask 130048
      %58 = vst.msk [vmem:[#allocation2] sm:$0xff] %vm57, 0.0
      %59 = vst.msk [vmem:[#allocation2 + $0x8] sm:$0xff] %vm57, 0.0
    $region13: #{tpu_custom_call.1} parent=1 // pred_fallthru
      _
    %v60 = vld [vmem:[%s43] sm:$0xff]
    %v61 = vld [vmem:[%s43 + $0x8] sm:$0xff]
    %v62 = vld [vmem:[%s43 + $0x10] sm:$0xff]
    %v63 = vld [vmem:[%s43 + $0x18] sm:$0xff]
    %v64 = vld [vmem:[%s43 + $0x20] sm:$0xff]
    %v65 = vld [vmem:[%s43 + $0x28] sm:$0xff]
    %v66 = vld [vmem:[%s43 + $0x30] sm:$0xff]
    %v67 = vld [vmem:[%s43 + $0x38] sm:$0xff]
    %v68 = vld [vmem:[%s43 + $0x40] sm:$0xff]
    %v69 = vld [vmem:[%s43 + $0x48] sm:$0xff]
    %v70 = vld [vmem:[%s43 + $0x50] sm:$0xff]
    %v71 = vld [vmem:[%s43 + $0x58] sm:$0xff]
    %v72 = vld [vmem:[%s43 + $0x60] sm:$0xff]
    %v73 = vld [vmem:[%s43 + $0x68] sm:$0xff]
    %v74 = vld [vmem:[%s43 + $0x70] sm:$0xff]
    %v75 = vld [vmem:[%s43 + $0x78] sm:$0xff]
    %v76 = vld [vmem:[%s43 + $0x80] sm:$0xff]
    %v77 = vld [vmem:[%s43 + $0x88] sm:$0xff]
    %v78 = vld [vmem:[%s43 + $0x90] sm:$0xff]
    %v79 = vld [vmem:[%s43 + $0x98] sm:$0xff]
    %v80 = vld [vmem:[%s43 + $0xa0] sm:$0xff]
    %v81 = vld [vmem:[%s43 + $0xa8] sm:$0xff]
    %v82 = vld [vmem:[%s43 + $0xb0] sm:$0xff]
    %v83 = vld [vmem:[%s43 + $0xb8] sm:$0xff]
    %v84 = vld [vmem:[%s43 + $0xc0] sm:$0xff]
    %v85 = vld [vmem:[%s43 + $0xc8] sm:$0xff]
    %v86 = vld [vmem:[%s43 + $0xd0] sm:$0xff]
    %v87 = vld [vmem:[%s43 + $0xd8] sm:$0xff]
    %v88 = vld [vmem:[%s43 + $0xe0] sm:$0xff]
    %v89 = vld [vmem:[%s43 + $0xe8] sm:$0xff]
    %v90 = vld [vmem:[%s43 + $0xf0] sm:$0xff]
    %v91 = vld [vmem:[%s43 + $0xf8] sm:$0xff]
    %v92 = vld [vmem:[%s50] sm:$0x3]
    %v93 = vlaneseq
    %v94 = vshrl.u32 %v93, 7
    %v95 = vadd.s32 %v94, 8
    %v96 = vlaneseq
    %v97 = vshrl.u32 %v96, 7
    %v98 = vsub.s32 0, %v97
    %v99 = vrot.slane %v92, %v98
    %v100 = vlaneseq
    %v101 = vshrl.u32 %v100, 7
    %v102 = vsub.s32 1, %v101
    %v103 = vrot.slane %v92, %v102
    %vm104 = vcmp.eq.s32.totalorder %v94, %v99
    %vm105 = vcmp.eq.s32.totalorder %v94, %v103
    %vm106 = vcmp.eq.s32.totalorder %v95, %v99
    %vm107 = vcmp.eq.s32.totalorder %v95, %v103
    %v108 = vsel %vm104, 1, 0
    %v109 = vsel %vm105, 1, 0
    %v110 = vsel %vm106, 1, 0
    %v111 = vsel %vm107, 1, 0
    %v112 = vcvt.s32.f32 %v108
    %v113 = vcvt.s32.f32 %v109
    %v114 = vcvt.s32.f32 %v110
    %v115 = vcvt.s32.f32 %v111
    %v116 = vld [vmem:[#allocation2] sm:$0xff]
    %v117 = vld [vmem:[#allocation2 + $0x8] sm:$0xff]
    %118 = vmatprep.subr.mxu0 0.0
    %v119 = vand.u32 %v60, 4294901760
    %120 = vmatpush1.msra.mxu0 %v119
    %121 = vmatprep.subr.mxu0 0.0
    %v122 = vand.u32 %v61, 4294901760
    %123 = vmatpush1.msra.mxu0 %v122
    %124 = vmatprep.subr.mxu0 0.0
    %v125 = vand.u32 %v62, 4294901760
    %126 = vmatpush1.msra.mxu0 %v125
    %127 = vmatprep.subr.mxu0 0.0
    %v128 = vand.u32 %v63, 4294901760
    %129 = vmatpush1.msra.mxu0 %v128
    %130 = vmatprep.subr.mxu0 0.0
    %v131 = vand.u32 %v64, 4294901760
    %132 = vmatpush1.msra.mxu0 %v131
    %133 = vmatprep.subr.mxu0 0.0
    %v134 = vand.u32 %v65, 4294901760
    %135 = vmatpush1.msra.mxu0 %v134
    %136 = vmatprep.subr.mxu0 0.0
    %v137 = vand.u32 %v66, 4294901760
    %138 = vmatpush1.msra.mxu0 %v137
    %139 = vmatprep.subr.mxu0 0.0
    %v140 = vand.u32 %v67, 4294901760
    %141 = vmatpush1.msra.mxu0 %v140
    %142 = vmatprep.subr.mxu0 0.0
    %v143 = vand.u32 %v68, 4294901760
    %144 = vmatpush1.msra.mxu0 %v143
    %145 = vmatprep.subr.mxu0 0.0
    %v146 = vand.u32 %v69, 4294901760
    %147 = vmatpush1.msra.mxu0 %v146
    %148 = vmatprep.subr.mxu0 0.0
    %v149 = vand.u32 %v70, 4294901760
    %150 = vmatpush1.msra.mxu0 %v149
    %151 = vmatprep.subr.mxu0 0.0
    %v152 = vand.u32 %v71, 4294901760
    %153 = vmatpush1.msra.mxu0 %v152
    %154 = vmatprep.subr.mxu0 0.0
    %v155 = vand.u32 %v72, 4294901760
    %156 = vmatpush1.msra.mxu0 %v155
    %157 = vmatprep.subr.mxu0 0.0
    %v158 = vand.u32 %v73, 4294901760
    %159 = vmatpush1.msra.mxu0 %v158
    %160 = vmatprep.subr.mxu0 0.0
    %v161 = vand.u32 %v74, 4294901760
    %162 = vmatpush1.msra.mxu0 %v161
    %163 = vmatprep.subr.mxu0 0.0
    %v164 = vand.u32 %v75, 4294901760
    %165 = vmatpush1.msra.mxu0 %v164
    %166 = vmatprep.subr.mxu0 0.0
    %v167 = vand.u32 %v76, 4294901760
    %168 = vmatpush1.msra.mxu0 %v167
    %169 = vmatprep.subr.mxu0 0.0
    %v170 = vand.u32 %v77, 4294901760
    %171 = vmatpush1.msra.mxu0 %v170
    %172 = vmatprep.subr.mxu0 0.0
    %v173 = vand.u32 %v78, 4294901760
    %174 = vmatpush1.msra.mxu0 %v173
    %175 = vmatprep.subr.mxu0 0.0
    %v176 = vand.u32 %v79, 4294901760
    %177 = vmatpush1.msra.mxu0 %v176
    %178 = vmatprep.subr.mxu0 0.0
    %v179 = vand.u32 %v80, 4294901760
    %180 = vmatpush1.msra.mxu0 %v179
    %181 = vmatprep.subr.mxu0 0.0
    %v182 = vand.u32 %v81, 4294901760
    %183 = vmatpush1.msra.mxu0 %v182
    %184 = vmatprep.subr.mxu0 0.0
    %v185 = vand.u32 %v82, 4294901760
    %186 = vmatpush1.msra.mxu0 %v185
    %187 = vmatprep.subr.mxu0 0.0
    %v188 = vand.u32 %v83, 4294901760
    %189 = vmatpush1.msra.mxu0 %v188
    %190 = vmatprep.subr.mxu0 0.0
    %v191 = vand.u32 %v84, 4294901760
    %192 = vmatpush1.msra.mxu0 %v191
    %193 = vmatprep.subr.mxu0 0.0
    %v194 = vand.u32 %v85, 4294901760
    %195 = vmatpush1.msra.mxu0 %v194
    %196 = vmatprep.subr.mxu0 0.0
    %v197 = vand.u32 %v86, 4294901760
    %198 = vmatpush1.msra.mxu0 %v197
    %199 = vmatprep.subr.mxu0 0.0
    %v200 = vand.u32 %v87, 4294901760
    %201 = vmatpush1.msra.mxu0 %v200
    %202 = vmatprep.subr.mxu0 0.0
    %v203 = vand.u32 %v88, 4294901760
    %204 = vmatpush1.msra.mxu0 %v203
    %205 = vmatprep.subr.mxu0 0.0
    %v206 = vand.u32 %v89, 4294901760
    %207 = vmatpush1.msra.mxu0 %v206
    %208 = vmatprep.subr.mxu0 0.0
    %v209 = vand.u32 %v90, 4294901760
    %210 = vmatpush1.msra.mxu0 %v209
    %211 = vmatprep.subr.mxu0 0.0
    %v212 = vand.u32 %v91, 4294901760
    %213 = vmatpush1.msra.mxu0 %v212
    %v214 = vand.u32 %v113, 4294901760
    %v215 = vsub.f32 %v113, %v214
    %v216 = vand.u32 %v215, 4294901760
    %v217 = vsub.f32 %v215, %v216
    %v218 = vand.u32 %v217, 4294901760
    %219 = vmatprep.mubr.f32.mxu0 %v218
    %v220 = vand.u32 %v112, 4294901760
    %v221 = vsub.f32 %v112, %v220
    %v222 = vand.u32 %v221, 4294901760
    %v223 = vsub.f32 %v221, %v222
    %v224 = vand.u32 %v223, 4294901760
    %225 = vmatmul.mubr.f32.gmra.mrb[0].mxu0 %v224
    %v226 = vpop.f32.mrb[0].mxu0
    %v227 = vadd.f32 0.0, %v226
    %v228 = vpop.f32.mrb[0].mxu0
    %v229 = vand.u32 %v115, 4294901760
    %v230 = vsub.f32 %v115, %v229
    %v231 = vand.u32 %v230, 4294901760
    %v232 = vsub.f32 %v230, %v231
    %v233 = vand.u32 %v232, 4294901760
    %234 = vmatprep.mubr.f32.mxu0 %v233
    %v235 = vand.u32 %v114, 4294901760
    %v236 = vsub.f32 %v114, %v235
    %v237 = vand.u32 %v236, 4294901760
    %v238 = vsub.f32 %v236, %v237
    %v239 = vand.u32 %v238, 4294901760
    %240 = vmatmul.mubr.f32.gmra.mrb[0].mxu0 %v239
    %v241 = vpop.f32.mrb[0].mxu0
    %v242 = vadd.f32 0.0, %v241
    %v243 = vpop.f32.mrb[0].mxu0
    %244 = vdwg.mxu0
    %245 = vmatprep.subr.mxu0 0.0
    %v246 = vand.u32 %v60, 4294901760
    %v247 = vsub.f32 %v60, %v246
    %v248 = vand.u32 %v247, 4294901760
    %v249 = vsub.f32 %v247, %v248
    %v250 = vand.u32 %v249, 4294901760
    %251 = vmatpush1.msra.mxu0 %v250
    %252 = vmatprep.subr.mxu0 0.0
    %v253 = vand.u32 %v61, 4294901760
    %v254 = vsub.f32 %v61, %v253
    %v255 = vand.u32 %v254, 4294901760
    %v256 = vsub.f32 %v254, %v255
    %v257 = vand.u32 %v256, 4294901760
    %258 = vmatpush1.msra.mxu0 %v257
    %259 = vmatprep.subr.mxu0 0.0
    %v260 = vand.u32 %v62, 4294901760
    %v261 = vsub.f32 %v62, %v260
    %v262 = vand.u32 %v261, 4294901760
    %v263 = vsub.f32 %v261, %v262
    %v264 = vand.u32 %v263, 4294901760
    %265 = vmatpush1.msra.mxu0 %v264
    %266 = vmatprep.subr.mxu0 0.0
    %v267 = vand.u32 %v63, 4294901760
    %v268 = vsub.f32 %v63, %v267
    %v269 = vand.u32 %v268, 4294901760
    %v270 = vsub.f32 %v268, %v269
    %v271 = vand.u32 %v270, 4294901760
    %272 = vmatpush1.msra.mxu0 %v271
    %273 = vmatprep.subr.mxu0 0.0
    %v274 = vand.u32 %v64, 4294901760
    %v275 = vsub.f32 %v64, %v274
    %v276 = vand.u32 %v275, 4294901760
    %v277 = vsub.f32 %v275, %v276
    %v278 = vand.u32 %v277, 4294901760
    %279 = vmatpush1.msra.mxu0 %v278
    %280 = vmatprep.subr.mxu0 0.0
    %v281 = vand.u32 %v65, 4294901760
    %v282 = vsub.f32 %v65, %v281
    %v283 = vand.u32 %v282, 4294901760
    %v284 = vsub.f32 %v282, %v283
    %v285 = vand.u32 %v284, 4294901760
    %286 = vmatpush1.msra.mxu0 %v285
    %287 = vmatprep.subr.mxu0 0.0
    %v288 = vand.u32 %v66, 4294901760
    %v289 = vsub.f32 %v66, %v288
    %v290 = vand.u32 %v289, 4294901760
    %v291 = vsub.f32 %v289, %v290
    %v292 = vand.u32 %v291, 4294901760
    %293 = vmatpush1.msra.mxu0 %v292
    %294 = vmatprep.subr.mxu0 0.0
    %v295 = vand.u32 %v67, 4294901760
    %v296 = vsub.f32 %v67, %v295
    %v297 = vand.u32 %v296, 4294901760
    %v298 = vsub.f32 %v296, %v297
    %v299 = vand.u32 %v298, 4294901760
    %300 = vmatpush1.msra.mxu0 %v299
    %301 = vmatprep.subr.mxu0 0.0
    %v302 = vand.u32 %v68, 4294901760
    %v303 = vsub.f32 %v68, %v302
    %v304 = vand.u32 %v303, 4294901760
    %v305 = vsub.f32 %v303, %v304
    %v306 = vand.u32 %v305, 4294901760
    %307 = vmatpush1.msra.mxu0 %v306
    %308 = vmatprep.subr.mxu0 0.0
    %v309 = vand.u32 %v69, 4294901760
    %v310 = vsub.f32 %v69, %v309
    %v311 = vand.u32 %v310, 4294901760
    %v312 = vsub.f32 %v310, %v311
    %v313 = vand.u32 %v312, 4294901760
    %314 = vmatpush1.msra.mxu0 %v313
    %315 = vmatprep.subr.mxu0 0.0
    %v316 = vand.u32 %v70, 4294901760
    %v317 = vsub.f32 %v70, %v316
    %v318 = vand.u32 %v317, 4294901760
    %v319 = vsub.f32 %v317, %v318
    %v320 = vand.u32 %v319, 4294901760
    %321 = vmatpush1.msra.mxu0 %v320
    %322 = vmatprep.subr.mxu0 0.0
    %v323 = vand.u32 %v71, 4294901760
    %v324 = vsub.f32 %v71, %v323
    %v325 = vand.u32 %v324, 4294901760
    %v326 = vsub.f32 %v324, %v325
    %v327 = vand.u32 %v326, 4294901760
    %328 = vmatpush1.msra.mxu0 %v327
    %329 = vmatprep.subr.mxu0 0.0
    %v330 = vand.u32 %v72, 4294901760
    %v331 = vsub.f32 %v72, %v330
    %v332 = vand.u32 %v331, 4294901760
    %v333 = vsub.f32 %v331, %v332
    %v334 = vand.u32 %v333, 4294901760
    %335 = vmatpush1.msra.mxu0 %v334
    %336 = vmatprep.subr.mxu0 0.0
    %v337 = vand.u32 %v73, 4294901760
    %v338 = vsub.f32 %v73, %v337
    %v339 = vand.u32 %v338, 4294901760
    %v340 = vsub.f32 %v338, %v339
    %v341 = vand.u32 %v340, 4294901760
    %342 = vmatpush1.msra.mxu0 %v341
    %343 = vmatprep.subr.mxu0 0.0
    %v344 = vand.u32 %v74, 4294901760
    %v345 = vsub.f32 %v74, %v344
    %v346 = vand.u32 %v345, 4294901760
    %v347 = vsub.f32 %v345, %v346
    %v348 = vand.u32 %v347, 4294901760
    %349 = vmatpush1.msra.mxu0 %v348
    %350 = vmatprep.subr.mxu0 0.0
    %v351 = vand.u32 %v75, 4294901760
    %v352 = vsub.f32 %v75, %v351
    %v353 = vand.u32 %v352, 4294901760
    %v354 = vsub.f32 %v352, %v353
    %v355 = vand.u32 %v354, 4294901760
    %356 = vmatpush1.msra.mxu0 %v355
    %357 = vmatprep.subr.mxu0 0.0
    %v358 = vand.u32 %v76, 4294901760
    %v359 = vsub.f32 %v76, %v358
    %v360 = vand.u32 %v359, 4294901760
    %v361 = vsub.f32 %v359, %v360
    %v362 = vand.u32 %v361, 4294901760
    %363 = vmatpush1.msra.mxu0 %v362
    %364 = vmatprep.subr.mxu0 0.0
    %v365 = vand.u32 %v77, 4294901760
    %v366 = vsub.f32 %v77, %v365
    %v367 = vand.u32 %v366, 4294901760
    %v368 = vsub.f32 %v366, %v367
    %v369 = vand.u32 %v368, 4294901760
    %370 = vmatpush1.msra.mxu0 %v369
    %371 = vmatprep.subr.mxu0 0.0
    %v372 = vand.u32 %v78, 4294901760
    %v373 = vsub.f32 %v78, %v372
    %v374 = vand.u32 %v373, 4294901760
    %v375 = vsub.f32 %v373, %v374
    %v376 = vand.u32 %v375, 4294901760
    %377 = vmatpush1.msra.mxu0 %v376
    %378 = vmatprep.subr.mxu0 0.0
    %v379 = vand.u32 %v79, 4294901760
    %v380 = vsub.f32 %v79, %v379
    %v381 = vand.u32 %v380, 4294901760
    %v382 = vsub.f32 %v380, %v381
    %v383 = vand.u32 %v382, 4294901760
    %384 = vmatpush1.msra.mxu0 %v383
    %385 = vmatprep.subr.mxu0 0.0
    %v386 = vand.u32 %v80, 4294901760
    %v387 = vsub.f32 %v80, %v386
    %v388 = vand.u32 %v387, 4294901760
    %v389 = vsub.f32 %v387, %v388
    %v390 = vand.u32 %v389, 4294901760
    %391 = vmatpush1.msra.mxu0 %v390
    %392 = vmatprep.subr.mxu0 0.0
    %v393 = vand.u32 %v81, 4294901760
    %v394 = vsub.f32 %v81, %v393
    %v395 = vand.u32 %v394, 4294901760
    %v396 = vsub.f32 %v394, %v395
    %v397 = vand.u32 %v396, 4294901760
    %398 = vmatpush1.msra.mxu0 %v397
    %399 = vmatprep.subr.mxu0 0.0
    %v400 = vand.u32 %v82, 4294901760
    %v401 = vsub.f32 %v82, %v400
    %v402 = vand.u32 %v401, 4294901760
    %v403 = vsub.f32 %v401, %v402
    %v404 = vand.u32 %v403, 4294901760
    %405 = vmatpush1.msra.mxu0 %v404
    %406 = vmatprep.subr.mxu0 0.0
    %v407 = vand.u32 %v83, 4294901760
    %v408 = vsub.f32 %v83, %v407
    %v409 = vand.u32 %v408, 4294901760
    %v410 = vsub.f32 %v408, %v409
    %v411 = vand.u32 %v410, 4294901760
    %412 = vmatpush1.msra.mxu0 %v411
    %413 = vmatprep.subr.mxu0 0.0
    %v414 = vand.u32 %v84, 4294901760
    %v415 = vsub.f32 %v84, %v414
    %v416 = vand.u32 %v415, 4294901760
    %v417 = vsub.f32 %v415, %v416
    %v418 = vand.u32 %v417, 4294901760
    %419 = vmatpush1.msra.mxu0 %v418
    %420 = vmatprep.subr.mxu0 0.0
    %v421 = vand.u32 %v85, 4294901760
    %v422 = vsub.f32 %v85, %v421
    %v423 = vand.u32 %v422, 4294901760
    %v424 = vsub.f32 %v422, %v423
    %v425 = vand.u32 %v424, 4294901760
    %426 = vmatpush1.msra.mxu0 %v425
    %427 = vmatprep.subr.mxu0 0.0
    %v428 = vand.u32 %v86, 4294901760
    %v429 = vsub.f32 %v86, %v428
    %v430 = vand.u32 %v429, 4294901760
    %v431 = vsub.f32 %v429, %v430
    %v432 = vand.u32 %v431, 4294901760
    %433 = vmatpush1.msra.mxu0 %v432
    %434 = vmatprep.subr.mxu0 0.0
    %v435 = vand.u32 %v87, 4294901760
    %v436 = vsub.f32 %v87, %v435
    %v437 = vand.u32 %v436, 4294901760
    %v438 = vsub.f32 %v436, %v437
    %v439 = vand.u32 %v438, 4294901760
    %440 = vmatpush1.msra.mxu0 %v439
    %441 = vmatprep.subr.mxu0 0.0
    %v442 = vand.u32 %v88, 4294901760
    %v443 = vsub.f32 %v88, %v442
    %v444 = vand.u32 %v443, 4294901760
    %v445 = vsub.f32 %v443, %v444
    %v446 = vand.u32 %v445, 4294901760
    %447 = vmatpush1.msra.mxu0 %v446
    %448 = vmatprep.subr.mxu0 0.0
    %v449 = vand.u32 %v89, 4294901760
    %v450 = vsub.f32 %v89, %v449
    %v451 = vand.u32 %v450, 4294901760
    %v452 = vsub.f32 %v450, %v451
    %v453 = vand.u32 %v452, 4294901760
    %454 = vmatpush1.msra.mxu0 %v453
    %455 = vmatprep.subr.mxu0 0.0
    %v456 = vand.u32 %v90, 4294901760
    %v457 = vsub.f32 %v90, %v456
    %v458 = vand.u32 %v457, 4294901760
    %v459 = vsub.f32 %v457, %v458
    %v460 = vand.u32 %v459, 4294901760
    %461 = vmatpush1.msra.mxu0 %v460
    %462 = vmatprep.subr.mxu0 0.0
    %v463 = vand.u32 %v91, 4294901760
    %v464 = vsub.f32 %v91, %v463
    %v465 = vand.u32 %v464, 4294901760
    %v466 = vsub.f32 %v464, %v465
    %v467 = vand.u32 %v466, 4294901760
    %468 = vmatpush1.msra.mxu0 %v467
    %v469 = vand.u32 %v113, 4294901760
    %470 = vmatprep.mubr.f32.mxu0 %v469
    %v471 = vand.u32 %v112, 4294901760
    %472 = vmatmul.mubr.f32.gmra.mrb[0].mxu0 %v471
    %v473 = vpop.f32.mrb[0].mxu0
    %v474 = vadd.f32 %v227, %v473
    %v475 = vpop.f32.mrb[0].mxu0
    %v476 = vand.u32 %v115, 4294901760
    %477 = vmatprep.mubr.f32.mxu0 %v476
    %v478 = vand.u32 %v114, 4294901760
    %479 = vmatmul.mubr.f32.gmra.mrb[0].mxu0 %v478
    %v480 = vpop.f32.mrb[0].mxu0
    %v481 = vadd.f32 %v242, %v480
    %v482 = vpop.f32.mrb[0].mxu0
    %483 = vdwg.mxu0
    %484 = vmatprep.subr.mxu0 0.0
    %v485 = vand.u32 %v60, 4294901760
    %v486 = vsub.f32 %v60, %v485
    %487 = vmatpush1.msra.mxu0 %v486
    %488 = vmatprep.subr.mxu0 0.0
    %v489 = vand.u32 %v61, 4294901760
    %v490 = vsub.f32 %v61, %v489
    %491 = vmatpush1.msra.mxu0 %v490
    %492 = vmatprep.subr.mxu0 0.0
    %v493 = vand.u32 %v62, 4294901760
    %v494 = vsub.f32 %v62, %v493
    %495 = vmatpush1.msra.mxu0 %v494
    %496 = vmatprep.subr.mxu0 0.0
    %v497 = vand.u32 %v63, 4294901760
    %v498 = vsub.f32 %v63, %v497
    %499 = vmatpush1.msra.mxu0 %v498
    %500 = vmatprep.subr.mxu0 0.0
    %v501 = vand.u32 %v64, 4294901760
    %v502 = vsub.f32 %v64, %v501
    %503 = vmatpush1.msra.mxu0 %v502
    %504 = vmatprep.subr.mxu0 0.0
    %v505 = vand.u32 %v65, 4294901760
    %v506 = vsub.f32 %v65, %v505
    %507 = vmatpush1.msra.mxu0 %v506
    %508 = vmatprep.subr.mxu0 0.0
    %v509 = vand.u32 %v66, 4294901760
    %v510 = vsub.f32 %v66, %v509
    %511 = vmatpush1.msra.mxu0 %v510
    %512 = vmatprep.subr.mxu0 0.0
    %v513 = vand.u32 %v67, 4294901760
    %v514 = vsub.f32 %v67, %v513
    %515 = vmatpush1.msra.mxu0 %v514
    %516 = vmatprep.subr.mxu0 0.0
    %v517 = vand.u32 %v68, 4294901760
    %v518 = vsub.f32 %v68, %v517
    %519 = vmatpush1.msra.mxu0 %v518
    %520 = vmatprep.subr.mxu0 0.0
    %v521 = vand.u32 %v69, 4294901760
    %v522 = vsub.f32 %v69, %v521
    %523 = vmatpush1.msra.mxu0 %v522
    %524 = vmatprep.subr.mxu0 0.0
    %v525 = vand.u32 %v70, 4294901760
    %v526 = vsub.f32 %v70, %v525
    %527 = vmatpush1.msra.mxu0 %v526
    %528 = vmatprep.subr.mxu0 0.0
    %v529 = vand.u32 %v71, 4294901760
    %v530 = vsub.f32 %v71, %v529
    %531 = vmatpush1.msra.mxu0 %v530
    %532 = vmatprep.subr.mxu0 0.0
    %v533 = vand.u32 %v72, 4294901760
    %v534 = vsub.f32 %v72, %v533
    %535 = vmatpush1.msra.mxu0 %v534
    %536 = vmatprep.subr.mxu0 0.0
    %v537 = vand.u32 %v73, 4294901760
    %v538 = vsub.f32 %v73, %v537
    %539 = vmatpush1.msra.mxu0 %v538
    %540 = vmatprep.subr.mxu0 0.0
    %v541 = vand.u32 %v74, 4294901760
    %v542 = vsub.f32 %v74, %v541
    %543 = vmatpush1.msra.mxu0 %v542
    %544 = vmatprep.subr.mxu0 0.0
    %v545 = vand.u32 %v75, 4294901760
    %v546 = vsub.f32 %v75, %v545
    %547 = vmatpush1.msra.mxu0 %v546
    %548 = vmatprep.subr.mxu0 0.0
    %v549 = vand.u32 %v76, 4294901760
    %v550 = vsub.f32 %v76, %v549
    %551 = vmatpush1.msra.mxu0 %v550
    %552 = vmatprep.subr.mxu0 0.0
    %v553 = vand.u32 %v77, 4294901760
    %v554 = vsub.f32 %v77, %v553
    %555 = vmatpush1.msra.mxu0 %v554
    %556 = vmatprep.subr.mxu0 0.0
    %v557 = vand.u32 %v78, 4294901760
    %v558 = vsub.f32 %v78, %v557
    %559 = vmatpush1.msra.mxu0 %v558
    %560 = vmatprep.subr.mxu0 0.0
    %v561 = vand.u32 %v79, 4294901760
    %v562 = vsub.f32 %v79, %v561
    %563 = vmatpush1.msra.mxu0 %v562
    %564 = vmatprep.subr.mxu0 0.0
    %v565 = vand.u32 %v80, 4294901760
    %v566 = vsub.f32 %v80, %v565
    %567 = vmatpush1.msra.mxu0 %v566
    %568 = vmatprep.subr.mxu0 0.0
    %v569 = vand.u32 %v81, 4294901760
    %v570 = vsub.f32 %v81, %v569
    %571 = vmatpush1.msra.mxu0 %v570
    %572 = vmatprep.subr.mxu0 0.0
    %v573 = vand.u32 %v82, 4294901760
    %v574 = vsub.f32 %v82, %v573
    %575 = vmatpush1.msra.mxu0 %v574
    %576 = vmatprep.subr.mxu0 0.0
    %v577 = vand.u32 %v83, 4294901760
    %v578 = vsub.f32 %v83, %v577
    %579 = vmatpush1.msra.mxu0 %v578
    %580 = vmatprep.subr.mxu0 0.0
    %v581 = vand.u32 %v84, 4294901760
    %v582 = vsub.f32 %v84, %v581
    %583 = vmatpush1.msra.mxu0 %v582
    %584 = vmatprep.subr.mxu0 0.0
    %v585 = vand.u32 %v85, 4294901760
    %v586 = vsub.f32 %v85, %v585
    %587 = vmatpush1.msra.mxu0 %v586
    %588 = vmatprep.subr.mxu0 0.0
    %v589 = vand.u32 %v86, 4294901760
    %v590 = vsub.f32 %v86, %v589
    %591 = vmatpush1.msra.mxu0 %v590
    %592 = vmatprep.subr.mxu0 0.0
    %v593 = vand.u32 %v87, 4294901760
    %v594 = vsub.f32 %v87, %v593
    %595 = vmatpush1.msra.mxu0 %v594
    %596 = vmatprep.subr.mxu0 0.0
    %v597 = vand.u32 %v88, 4294901760
    %v598 = vsub.f32 %v88, %v597
    %599 = vmatpush1.msra.mxu0 %v598
    %600 = vmatprep.subr.mxu0 0.0
    %v601 = vand.u32 %v89, 4294901760
    %v602 = vsub.f32 %v89, %v601
    %603 = vmatpush1.msra.mxu0 %v602
    %604 = vmatprep.subr.mxu0 0.0
    %v605 = vand.u32 %v90, 4294901760
    %v606 = vsub.f32 %v90, %v605
    %607 = vmatpush1.msra.mxu0 %v606
    %608 = vmatprep.subr.mxu0 0.0
    %v609 = vand.u32 %v91, 4294901760
    %v610 = vsub.f32 %v91, %v609
    %611 = vmatpush1.msra.mxu0 %v610
    %v612 = vand.u32 %v113, 4294901760
    %v613 = vsub.f32 %v113, %v612
    %614 = vmatprep.mubr.f32.mxu0 %v613
    %v615 = vand.u32 %v112, 4294901760
    %v616 = vsub.f32 %v112, %v615
    %617 = vmatmul.mubr.f32.gmra.mrb[0].mxu0 %v616
    %v618 = vpop.f32.mrb[0].mxu0
    %v619 = vadd.f32 %v474, %v618
    %v620 = vpop.f32.mrb[0].mxu0
    %v621 = vand.u32 %v115, 4294901760
    %v622 = vsub.f32 %v115, %v621
    %623 = vmatprep.mubr.f32.mxu0 %v622
    %v624 = vand.u32 %v114, 4294901760
    %v625 = vsub.f32 %v114, %v624
    %626 = vmatmul.mubr.f32.gmra.mrb[0].mxu0 %v625
    %v627 = vpop.f32.mrb[0].mxu0
    %v628 = vadd.f32 %v481, %v627
    %v629 = vpop.f32.mrb[0].mxu0
    %630 = vdwg.mxu0
    %631 = vmatprep.subr.mxu0 0.0
    %v632 = vand.u32 %v60, 4294901760
    %633 = vmatpush1.msra.mxu0 %v632
    %634 = vmatprep.subr.mxu0 0.0
    %v635 = vand.u32 %v61, 4294901760
    %636 = vmatpush1.msra.mxu0 %v635
    %637 = vmatprep.subr.mxu0 0.0
    %v638 = vand.u32 %v62, 4294901760
    %639 = vmatpush1.msra.mxu0 %v638
    %640 = vmatprep.subr.mxu0 0.0
    %v641 = vand.u32 %v63, 4294901760
    %642 = vmatpush1.msra.mxu0 %v641
    %643 = vmatprep.subr.mxu0 0.0
    %v644 = vand.u32 %v64, 4294901760
    %645 = vmatpush1.msra.mxu0 %v644
    %646 = vmatprep.subr.mxu0 0.0
    %v647 = vand.u32 %v65, 4294901760
    %648 = vmatpush1.msra.mxu0 %v647
    %649 = vmatprep.subr.mxu0 0.0
    %v650 = vand.u32 %v66, 4294901760
    %651 = vmatpush1.msra.mxu0 %v650
    %652 = vmatprep.subr.mxu0 0.0
    %v653 = vand.u32 %v67, 4294901760
    %654 = vmatpush1.msra.mxu0 %v653
    %655 = vmatprep.subr.mxu0 0.0
    %v656 = vand.u32 %v68, 4294901760
    %657 = vmatpush1.msra.mxu0 %v656
    %658 = vmatprep.subr.mxu0 0.0
    %v659 = vand.u32 %v69, 4294901760
    %660 = vmatpush1.msra.mxu0 %v659
    %661 = vmatprep.subr.mxu0 0.0
    %v662 = vand.u32 %v70, 4294901760
    %663 = vmatpush1.msra.mxu0 %v662
    %664 = vmatprep.subr.mxu0 0.0
    %v665 = vand.u32 %v71, 4294901760
    %666 = vmatpush1.msra.mxu0 %v665
    %667 = vmatprep.subr.mxu0 0.0
    %v668 = vand.u32 %v72, 4294901760
    %669 = vmatpush1.msra.mxu0 %v668
    %670 = vmatprep.subr.mxu0 0.0
    %v671 = vand.u32 %v73, 4294901760
    %672 = vmatpush1.msra.mxu0 %v671
    %673 = vmatprep.subr.mxu0 0.0
    %v674 = vand.u32 %v74, 4294901760
    %675 = vmatpush1.msra.mxu0 %v674
    %676 = vmatprep.subr.mxu0 0.0
    %v677 = vand.u32 %v75, 4294901760
    %678 = vmatpush1.msra.mxu0 %v677
    %679 = vmatprep.subr.mxu0 0.0
    %v680 = vand.u32 %v76, 4294901760
    %681 = vmatpush1.msra.mxu0 %v680
    %682 = vmatprep.subr.mxu0 0.0
    %v683 = vand.u32 %v77, 4294901760
    %684 = vmatpush1.msra.mxu0 %v683
    %685 = vmatprep.subr.mxu0 0.0
    %v686 = vand.u32 %v78, 4294901760
    %687 = vmatpush1.msra.mxu0 %v686
    %688 = vmatprep.subr.mxu0 0.0
    %v689 = vand.u32 %v79, 4294901760
    %690 = vmatpush1.msra.mxu0 %v689
    %691 = vmatprep.subr.mxu0 0.0
    %v692 = vand.u32 %v80, 4294901760
    %693 = vmatpush1.msra.mxu0 %v692
    %694 = vmatprep.subr.mxu0 0.0
    %v695 = vand.u32 %v81, 4294901760
    %696 = vmatpush1.msra.mxu0 %v695
    %697 = vmatprep.subr.mxu0 0.0
    %v698 = vand.u32 %v82, 4294901760
    %699 = vmatpush1.msra.mxu0 %v698
    %700 = vmatprep.subr.mxu0 0.0
    %v701 = vand.u32 %v83, 4294901760
    %702 = vmatpush1.msra.mxu0 %v701
    %703 = vmatprep.subr.mxu0 0.0
    %v704 = vand.u32 %v84, 4294901760
    %705 = vmatpush1.msra.mxu0 %v704
    %706 = vmatprep.subr.mxu0 0.0
    %v707 = vand.u32 %v85, 4294901760
    %708 = vmatpush1.msra.mxu0 %v707
    %709 = vmatprep.subr.mxu0 0.0
    %v710 = vand.u32 %v86, 4294901760
    %711 = vmatpush1.msra.mxu0 %v710
    %712 = vmatprep.subr.mxu0 0.0
    %v713 = vand.u32 %v87, 4294901760
    %714 = vmatpush1.msra.mxu0 %v713
    %715 = vmatprep.subr.mxu0 0.0
    %v716 = vand.u32 %v88, 4294901760
    %717 = vmatpush1.msra.mxu0 %v716
    %718 = vmatprep.subr.mxu0 0.0
    %v719 = vand.u32 %v89, 4294901760
    %720 = vmatpush1.msra.mxu0 %v719
    %721 = vmatprep.subr.mxu0 0.0
    %v722 = vand.u32 %v90, 4294901760
    %723 = vmatpush1.msra.mxu0 %v722
    %724 = vmatprep.subr.mxu0 0.0
    %v725 = vand.u32 %v91, 4294901760
    %726 = vmatpush1.msra.mxu0 %v725
    %v727 = vand.u32 %v113, 4294901760
    %v728 = vsub.f32 %v113, %v727
    %v729 = vand.u32 %v728, 4294901760
    %730 = vmatprep.mubr.f32.mxu0 %v729
    %v731 = vand.u32 %v112, 4294901760
    %v732 = vsub.f32 %v112, %v731
    %v733 = vand.u32 %v732, 4294901760
    %734 = vmatmul.mubr.f32.gmra.mrb[0].mxu0 %v733
    %v735 = vpop.f32.mrb[0].mxu0
    %v736 = vadd.f32 %v619, %v735
    %v737 = vpop.f32.mrb[0].mxu0
    %v738 = vand.u32 %v115, 4294901760
    %v739 = vsub.f32 %v115, %v738
    %v740 = vand.u32 %v739, 4294901760
    %741 = vmatprep.mubr.f32.mxu0 %v740
    %v742 = vand.u32 %v114, 4294901760
    %v743 = vsub.f32 %v114, %v742
    %v744 = vand.u32 %v743, 4294901760
    %745 = vmatmul.mubr.f32.gmra.mrb[0].mxu0 %v744
    %v746 = vpop.f32.mrb[0].mxu0
    %v747 = vadd.f32 %v628, %v746
    %v748 = vpop.f32.mrb[0].mxu0
    %749 = vdwg.mxu0
    %750 = vmatprep.subr.mxu0 0.0
    %v751 = vand.u32 %v60, 4294901760
    %v752 = vsub.f32 %v60, %v751
    %v753 = vand.u32 %v752, 4294901760
    %754 = vmatpush1.msra.mxu0 %v753
    %755 = vmatprep.subr.mxu0 0.0
    %v756 = vand.u32 %v61, 4294901760
    %v757 = vsub.f32 %v61, %v756
    %v758 = vand.u32 %v757, 4294901760
    %759 = vmatpush1.msra.mxu0 %v758
    %760 = vmatprep.subr.mxu0 0.0
    %v761 = vand.u32 %v62, 4294901760
    %v762 = vsub.f32 %v62, %v761
    %v763 = vand.u32 %v762, 4294901760
    %764 = vmatpush1.msra.mxu0 %v763
    %765 = vmatprep.subr.mxu0 0.0
    %v766 = vand.u32 %v63, 4294901760
    %v767 = vsub.f32 %v63, %v766
    %v768 = vand.u32 %v767, 4294901760
    %769 = vmatpush1.msra.mxu0 %v768
    %770 = vmatprep.subr.mxu0 0.0
    %v771 = vand.u32 %v64, 4294901760
    %v772 = vsub.f32 %v64, %v771
    %v773 = vand.u32 %v772, 4294901760
    %774 = vmatpush1.msra.mxu0 %v773
    %775 = vmatprep.subr.mxu0 0.0
    %v776 = vand.u32 %v65, 4294901760
    %v777 = vsub.f32 %v65, %v776
    %v778 = vand.u32 %v777, 4294901760
    %779 = vmatpush1.msra.mxu0 %v778
    %780 = vmatprep.subr.mxu0 0.0
    %v781 = vand.u32 %v66, 4294901760
    %v782 = vsub.f32 %v66, %v781
    %v783 = vand.u32 %v782, 4294901760
    %784 = vmatpush1.msra.mxu0 %v783
    %785 = vmatprep.subr.mxu0 0.0
    %v786 = vand.u32 %v67, 4294901760
    %v787 = vsub.f32 %v67, %v786
    %v788 = vand.u32 %v787, 4294901760
    %789 = vmatpush1.msra.mxu0 %v788
    %790 = vmatprep.subr.mxu0 0.0
    %v791 = vand.u32 %v68, 4294901760
    %v792 = vsub.f32 %v68, %v791
    %v793 = vand.u32 %v792, 4294901760
    %794 = vmatpush1.msra.mxu0 %v793
    %795 = vmatprep.subr.mxu0 0.0
    %v796 = vand.u32 %v69, 4294901760
    %v797 = vsub.f32 %v69, %v796
    %v798 = vand.u32 %v797, 4294901760
    %799 = vmatpush1.msra.mxu0 %v798
    %800 = vmatprep.subr.mxu0 0.0
    %v801 = vand.u32 %v70, 4294901760
    %v802 = vsub.f32 %v70, %v801
    %v803 = vand.u32 %v802, 4294901760
    %804 = vmatpush1.msra.mxu0 %v803
    %805 = vmatprep.subr.mxu0 0.0
    %v806 = vand.u32 %v71, 4294901760
    %v807 = vsub.f32 %v71, %v806
    %v808 = vand.u32 %v807, 4294901760
    %809 = vmatpush1.msra.mxu0 %v808
    %810 = vmatprep.subr.mxu0 0.0
    %v811 = vand.u32 %v72, 4294901760
    %v812 = vsub.f32 %v72, %v811
    %v813 = vand.u32 %v812, 4294901760
    %814 = vmatpush1.msra.mxu0 %v813
    %815 = vmatprep.subr.mxu0 0.0
    %v816 = vand.u32 %v73, 4294901760
    %v817 = vsub.f32 %v73, %v816
    %v818 = vand.u32 %v817, 4294901760
    %819 = vmatpush1.msra.mxu0 %v818
    %820 = vmatprep.subr.mxu0 0.0
    %v821 = vand.u32 %v74, 4294901760
    %v822 = vsub.f32 %v74, %v821
    %v823 = vand.u32 %v822, 4294901760
    %824 = vmatpush1.msra.mxu0 %v823
    %825 = vmatprep.subr.mxu0 0.0
    %v826 = vand.u32 %v75, 4294901760
    %v827 = vsub.f32 %v75, %v826
    %v828 = vand.u32 %v827, 4294901760
    %829 = vmatpush1.msra.mxu0 %v828
    %830 = vmatprep.subr.mxu0 0.0
    %v831 = vand.u32 %v76, 4294901760
    %v832 = vsub.f32 %v76, %v831
    %v833 = vand.u32 %v832, 4294901760
    %834 = vmatpush1.msra.mxu0 %v833
    %835 = vmatprep.subr.mxu0 0.0
    %v836 = vand.u32 %v77, 4294901760
    %v837 = vsub.f32 %v77, %v836
    %v838 = vand.u32 %v837, 4294901760
    %839 = vmatpush1.msra.mxu0 %v838
    %840 = vmatprep.subr.mxu0 0.0
    %v841 = vand.u32 %v78, 4294901760
    %v842 = vsub.f32 %v78, %v841
    %v843 = vand.u32 %v842, 4294901760
    %844 = vmatpush1.msra.mxu0 %v843
    %845 = vmatprep.subr.mxu0 0.0
    %v846 = vand.u32 %v79, 4294901760
    %v847 = vsub.f32 %v79, %v846
    %v848 = vand.u32 %v847, 4294901760
    %849 = vmatpush1.msra.mxu0 %v848
    %850 = vmatprep.subr.mxu0 0.0
    %v851 = vand.u32 %v80, 4294901760
    %v852 = vsub.f32 %v80, %v851
    %v853 = vand.u32 %v852, 4294901760
    %854 = vmatpush1.msra.mxu0 %v853
    %855 = vmatprep.subr.mxu0 0.0
    %v856 = vand.u32 %v81, 4294901760
    %v857 = vsub.f32 %v81, %v856
    %v858 = vand.u32 %v857, 4294901760
    %859 = vmatpush1.msra.mxu0 %v858
    %860 = vmatprep.subr.mxu0 0.0
    %v861 = vand.u32 %v82, 4294901760
    %v862 = vsub.f32 %v82, %v861
    %v863 = vand.u32 %v862, 4294901760
    %864 = vmatpush1.msra.mxu0 %v863
    %865 = vmatprep.subr.mxu0 0.0
    %v866 = vand.u32 %v83, 4294901760
    %v867 = vsub.f32 %v83, %v866
    %v868 = vand.u32 %v867, 4294901760
    %869 = vmatpush1.msra.mxu0 %v868
    %870 = vmatprep.subr.mxu0 0.0
    %v871 = vand.u32 %v84, 4294901760
    %v872 = vsub.f32 %v84, %v871
    %v873 = vand.u32 %v872, 4294901760
    %874 = vmatpush1.msra.mxu0 %v873
    %875 = vmatprep.subr.mxu0 0.0
    %v876 = vand.u32 %v85, 4294901760
    %v877 = vsub.f32 %v85, %v876
    %v878 = vand.u32 %v877, 4294901760
    %879 = vmatpush1.msra.mxu0 %v878
    %880 = vmatprep.subr.mxu0 0.0
    %v881 = vand.u32 %v86, 4294901760
    %v882 = vsub.f32 %v86, %v881
    %v883 = vand.u32 %v882, 4294901760
    %884 = vmatpush1.msra.mxu0 %v883
    %885 = vmatprep.subr.mxu0 0.0
    %v886 = vand.u32 %v87, 4294901760
    %v887 = vsub.f32 %v87, %v886
    %v888 = vand.u32 %v887, 4294901760
    %889 = vmatpush1.msra.mxu0 %v888
    %890 = vmatprep.subr.mxu0 0.0
    %v891 = vand.u32 %v88, 4294901760
    %v892 = vsub.f32 %v88, %v891
    %v893 = vand.u32 %v892, 4294901760
    %894 = vmatpush1.msra.mxu0 %v893
    %895 = vmatprep.subr.mxu0 0.0
    %v896 = vand.u32 %v89, 4294901760
    %v897 = vsub.f32 %v89, %v896
    %v898 = vand.u32 %v897, 4294901760
    %899 = vmatpush1.msra.mxu0 %v898
    %900 = vmatprep.subr.mxu0 0.0
    %v901 = vand.u32 %v90, 4294901760
    %v902 = vsub.f32 %v90, %v901
    %v903 = vand.u32 %v902, 4294901760
    %904 = vmatpush1.msra.mxu0 %v903
    %905 = vmatprep.subr.mxu0 0.0
    %v906 = vand.u32 %v91, 4294901760
    %v907 = vsub.f32 %v91, %v906
    %v908 = vand.u32 %v907, 4294901760
    %909 = vmatpush1.msra.mxu0 %v908
    %v910 = vand.u32 %v113, 4294901760
    %911 = vmatprep.mubr.f32.mxu0 %v910
    %v912 = vand.u32 %v112, 4294901760
    %913 = vmatmul.mubr.f32.gmra.mrb[0].mxu0 %v912
    %v914 = vpop.f32.mrb[0].mxu0
    %v915 = vadd.f32 %v736, %v914
    %v916 = vpop.f32.mrb[0].mxu0
    %v917 = vand.u32 %v115, 4294901760
    %918 = vmatprep.mubr.f32.mxu0 %v917
    %v919 = vand.u32 %v114, 4294901760
    %920 = vmatmul.mubr.f32.gmra.mrb[0].mxu0 %v919
    %v921 = vpop.f32.mrb[0].mxu0
    %v922 = vadd.f32 %v747, %v921
    %v923 = vpop.f32.mrb[0].mxu0
    %924 = vdwg.mxu0
    %925 = vmatprep.subr.mxu0 0.0
    %v926 = vand.u32 %v60, 4294901760
    %927 = vmatpush1.msra.mxu0 %v926
    %928 = vmatprep.subr.mxu0 0.0
    %v929 = vand.u32 %v61, 4294901760
    %930 = vmatpush1.msra.mxu0 %v929
    %931 = vmatprep.subr.mxu0 0.0
    %v932 = vand.u32 %v62, 4294901760
    %933 = vmatpush1.msra.mxu0 %v932
    %934 = vmatprep.subr.mxu0 0.0
    %v935 = vand.u32 %v63, 4294901760
    %936 = vmatpush1.msra.mxu0 %v935
    %937 = vmatprep.subr.mxu0 0.0
    %v938 = vand.u32 %v64, 4294901760
    %939 = vmatpush1.msra.mxu0 %v938
    %940 = vmatprep.subr.mxu0 0.0
    %v941 = vand.u32 %v65, 4294901760
    %942 = vmatpush1.msra.mxu0 %v941
    %943 = vmatprep.subr.mxu0 0.0
    %v944 = vand.u32 %v66, 4294901760
    %945 = vmatpush1.msra.mxu0 %v944
    %946 = vmatprep.subr.mxu0 0.0
    %v947 = vand.u32 %v67, 4294901760
    %948 = vmatpush1.msra.mxu0 %v947
    %949 = vmatprep.subr.mxu0 0.0
    %v950 = vand.u32 %v68, 4294901760
    %951 = vmatpush1.msra.mxu0 %v950
    %952 = vmatprep.subr.mxu0 0.0
    %v953 = vand.u32 %v69, 4294901760
    %954 = vmatpush1.msra.mxu0 %v953
    %955 = vmatprep.subr.mxu0 0.0
    %v956 = vand.u32 %v70, 4294901760
    %957 = vmatpush1.msra.mxu0 %v956
    %958 = vmatprep.subr.mxu0 0.0
    %v959 = vand.u32 %v71, 4294901760
    %960 = vmatpush1.msra.mxu0 %v959
    %961 = vmatprep.subr.mxu0 0.0
    %v962 = vand.u32 %v72, 4294901760
    %963 = vmatpush1.msra.mxu0 %v962
    %964 = vmatprep.subr.mxu0 0.0
    %v965 = vand.u32 %v73, 4294901760
    %966 = vmatpush1.msra.mxu0 %v965
    %967 = vmatprep.subr.mxu0 0.0
    %v968 = vand.u32 %v74, 4294901760
    %969 = vmatpush1.msra.mxu0 %v968
    %970 = vmatprep.subr.mxu0 0.0
    %v971 = vand.u32 %v75, 4294901760
    %972 = vmatpush1.msra.mxu0 %v971
    %973 = vmatprep.subr.mxu0 0.0
    %v974 = vand.u32 %v76, 4294901760
    %975 = vmatpush1.msra.mxu0 %v974
    %976 = vmatprep.subr.mxu0 0.0
    %v977 = vand.u32 %v77, 4294901760
    %978 = vmatpush1.msra.mxu0 %v977
    %979 = vmatprep.subr.mxu0 0.0
    %v980 = vand.u32 %v78, 4294901760
    %981 = vmatpush1.msra.mxu0 %v980
    %982 = vmatprep.subr.mxu0 0.0
    %v983 = vand.u32 %v79, 4294901760
    %984 = vmatpush1.msra.mxu0 %v983
    %985 = vmatprep.subr.mxu0 0.0
    %v986 = vand.u32 %v80, 4294901760
    %987 = vmatpush1.msra.mxu0 %v986
    %988 = vmatprep.subr.mxu0 0.0
    %v989 = vand.u32 %v81, 4294901760
    %990 = vmatpush1.msra.mxu0 %v989
    %991 = vmatprep.subr.mxu0 0.0
    %v992 = vand.u32 %v82, 4294901760
    %993 = vmatpush1.msra.mxu0 %v992
    %994 = vmatprep.subr.mxu0 0.0
    %v995 = vand.u32 %v83, 4294901760
    %996 = vmatpush1.msra.mxu0 %v995
    %997 = vmatprep.subr.mxu0 0.0
    %v998 = vand.u32 %v84, 4294901760
    %999 = vmatpush1.msra.mxu0 %v998
    %1000 = vmatprep.subr.mxu0 0.0
    %v1001 = vand.u32 %v85, 4294901760
    %1002 = vmatpush1.msra.mxu0 %v1001
    %1003 = vmatprep.subr.mxu0 0.0
    %v1004 = vand.u32 %v86, 4294901760
    %1005 = vmatpush1.msra.mxu0 %v1004
    %1006 = vmatprep.subr.mxu0 0.0
    %v1007 = vand.u32 %v87, 4294901760
    %1008 = vmatpush1.msra.mxu0 %v1007
    %1009 = vmatprep.subr.mxu0 0.0
    %v1010 = vand.u32 %v88, 4294901760
    %1011 = vmatpush1.msra.mxu0 %v1010
    %1012 = vmatprep.subr.mxu0 0.0
    %v1013 = vand.u32 %v89, 4294901760
    %1014 = vmatpush1.msra.mxu0 %v1013
    %1015 = vmatprep.subr.mxu0 0.0
    %v1016 = vand.u32 %v90, 4294901760
    %1017 = vmatpush1.msra.mxu0 %v1016
    %1018 = vmatprep.subr.mxu0 0.0
    %v1019 = vand.u32 %v91, 4294901760
    %1020 = vmatpush1.msra.mxu0 %v1019
    %v1021 = vand.u32 %v113, 4294901760
    %1022 = vmatprep.mubr.f32.mxu0 %v1021
    %v1023 = vand.u32 %v112, 4294901760
    %1024 = vmatmul.mubr.f32.gmra.mrb[0].mxu0 %v1023
    %v1025 = vpop.f32.mrb[0].mxu0
    %v1026 = vadd.f32 %v915, %v1025
    %v1027 = vpop.f32.mrb[0].mxu0
    %v1028 = vand.u32 %v115, 4294901760
    %1029 = vmatprep.mubr.f32.mxu0 %v1028
    %v1030 = vand.u32 %v114, 4294901760
    %1031 = vmatmul.mubr.f32.gmra.mrb[0].mxu0 %v1030
    %v1032 = vpop.f32.mrb[0].mxu0
    %v1033 = vadd.f32 %v922, %v1032
    %v1034 = vpop.f32.mrb[0].mxu0
    %1035 = vdwg.mxu0
    %v1036 = vadd.f32 %v116, %v1026
    %v1037 = vadd.f32 %v117, %v1033
    %vm1038 = vcmask 130048
    %1039 = vst.msk [vmem:[#allocation2] sm:$0xff] %vm1038, %v1036
    %1040 = vst.msk [vmem:[#allocation2 + $0x8] sm:$0xff] %vm1038, %v1037
    // Predicated region
    $region14: #{tpu_custom_call.1} parent=1 // pred_check
      %p1041 = pneg %p53
    $region15: #{tpu_custom_call.1} parent=1 // pred_check_branch
      %1043 = sbr.rel (%p1041) target = $region17
    $region16: #{tpu_custom_call.1} parent=1 // pred_region
      %v1044 = vlaneseq
      %v1045 = vand.u32 %v1044, 127
      %vm1046 = vcmp.eq.s32.totalorder %v94, %v1045
      %vm1047 = vcmp.eq.s32.totalorder %v95, %v1045
      %v1048 = vld [vmem:[#allocation2] sm:$0xff]
      %v1049 = vld [vmem:[#allocation2 + $0x8] sm:$0xff]
      %v1050 = vsel %vm1046, %v1048, 0.0
      %v1051 = vsel %vm1047, %v1049, 0.0
      %v1052 = vsel %vm1038, %v1050, 0.0
      %v1053 = vsel %vm1038, %v1051, 0.0
      %v1054 = vadd.f32 %v1052, %v1053
      %1055 = vadd.xlane.f32.xlu0 %v1054
      %v1056 = vpop.xlane.xlu0 %1055
      %v1057 = vrot.slane %v1056, 4
      %v1058 = vadd.f32 %v1056, %v1057
      %v1059 = vrot.slane %v1058, 2
      %v1060 = vadd.f32 %v1058, %v1059
      %v1061 = vrot.slane %v1060, 1
      %v1062 = vadd.f32 %v1060, %v1061
      %s1063 = vtos %v1062
      %v1064 = vstv %s1063
      %1065 = vst [vmem:[#allocation3] sm:$0xff] %v1064
    $region17: #{tpu_custom_call.1} parent=1 // pred_fallthru
      _
    // Predicated region
    $region18: #{tpu_custom_call.1} parent=1 // pred_check
      _
    $region19: #{tpu_custom_call.1} parent=1 // pred_check_branch
      %1067 = sbr.rel (0) target = $region21
    $region20: #{tpu_custom_call.1} parent=1 // pred_region
      %s1069 = ssub.s32 128, 128
      %1070 = vsyncadd [#allocation4], %s1069
      %s1072 = sshll.u32 [#allocation3], 4
      %s1073 = int_to_ptr.vmem [resolvable:$true] %s1072
      %1075 = dma.vmem_to_hbm [thread:$0]  %s1073, 128, %s2, [#allocation4]
    $region21: #{tpu_custom_call.1} parent=1 // pred_fallthru
      _
    // Predicated region
    $region22: #{tpu_custom_call.1} parent=1 // pred_check
      _
    $region23: #{tpu_custom_call.1} parent=1 // pred_check_branch
      %1077 = sbr.rel (0) target = $region25
    $region24: #{tpu_custom_call.1} parent=1 // pred_region
      %1078 = dma.done [#allocation4], 128
    $region25: #{tpu_custom_call.1} parent=1 // pred_fallthru
      _
    %1079 = vsyncpa [#allocation4], 1

</llo_original>
